<compile_context>
chip_gen: v5e
topology: v5e:2x2
jax: 0.10.0
libtpu: 0.0.40
codegen_flags: <defaults>
</compile_context>

<pallas_src>
import functools
import math

import jax
import jax.numpy as jnp
from jax.experimental import pallas as pl
from jax.experimental.pallas import tpu as pltpu


def _round_up(x, m):
    return ((x + m - 1) // m) * m


def _gelu(h, approximate):
    # h is f32.  Default: exact erf GELU (matches torch.nn.GELU()).  The
    # tanh approximation routes through the EUP slot (free under the MXU
    # stream) if the caller can tolerate the numerics change.
    if approximate:
        return jax.nn.gelu(h, approximate=True)
    return 0.5 * h * (1.0 + jax.lax.erf(h * jnp.float32(1.0 / math.sqrt(2.0))))


def mlp_kernel_resident(x_ref, w1_ref, b1_ref, w2_ref, b2_ref, o_ref, *,
                        precision, gelu_approximate):
    """Weights grid-resident: one fused step per row tile (no K loop / acc RMW).

    x_ref: (tm, E)   w1_ref: (E, H)   b1_ref: (1, H) f32
    w2_ref: (H, E)   b2_ref: (1, E) f32   o_ref: (tm, E)
    """
    h = jnp.dot(x_ref[...], w1_ref[...],
                preferred_element_type=jnp.float32,
                precision=precision) + b1_ref[...]
    h = _gelu(h, gelu_approximate)
    out = jnp.dot(h.astype(w2_ref.dtype), w2_ref[...],
                  preferred_element_type=jnp.float32,
                  precision=precision) + b2_ref[...]
    o_ref[...] = out.astype(o_ref.dtype)


def mlp_kernel_tiled(x_ref, w1_ref, b1_ref, w2_ref, b2_ref, o_ref, acc_ref, *,
                     precision, gelu_approximate):
    """Hidden dim streamed in lane-aligned tiles; f32 accumulator over K.

    x_ref: (tm, E)   w1_ref: (E, th)  b1_ref: (1, th) f32
    w2_ref: (th, E)  b2_ref: (1, E) f32   o_ref: (tm, E)
    acc_ref: f32 (tm, E) scratch, resident across the H (k) axis.
    """
    k = pl.program_id(1)

    @pl.when(k == 0)
    def _():
        acc_ref[...] = jnp.zeros_like(acc_ref)

    h = jnp.dot(x_ref[...], w1_ref[...],
                preferred_element_type=jnp.float32,
                precision=precision) + b1_ref[...]
    h = _gelu(h, gelu_approximate)
    acc_ref[...] += jnp.dot(h.astype(w2_ref.dtype), w2_ref[...],
                            preferred_element_type=jnp.float32,
                            precision=precision)

    @pl.when(k == pl.num_programs(1) - 1)
    def _():
        # b2 added exactly once, at finalize.
        o_ref[...] = (acc_ref[...] + b2_ref[...]).astype(o_ref.dtype)


def mlp_pallas(x, w1, b1, w2, b2, *,
               compute_dtype=jnp.bfloat16,
               tm=512, th=512,
               weight_resident=None,
               gelu_approximate=False,
               vmem_budget_bytes=48 * 1024 * 1024):
    """x: (B, T, E). w1: (E, 4E), b1: (1, 4E), w2: (4E, E), b2: (1, E).

    compute_dtype: dtype of the MXU operands (x, W1, W2, and the GELU output);
      accumulation is always f32.  bf16 (default) changes numerics slightly.
    weight_resident: None = auto (fit check vs vmem_budget_bytes);
      True/False to force the resident / hidden-tiled path.
    """
    B, T, E = x.shape
    E_in, H = w1.shape
    assert E_in == E and w2.shape == (H, E)
    assert b1.shape == (1, H) and b2.shape == (1, E)

    out_dtype = x.dtype
    M = B * T
    x2d = x.reshape(M, E)

    # ---- operand dtypes: bf16 MXU operands + f32 accumulation by default ----
    cd = jnp.dtype(compute_dtype)
    x2d = x2d.astype(cd)
    w1c = w1.astype(cd)
    w2c = w2.astype(cd)
    b1f = b1.astype(jnp.float32)
    b2f = b2.astype(jnp.float32)
    # For f32 operands, pin the matmul precision (otherwise TPU may silently
    # run reduced-precision bf16 passes).  For bf16, the default path is fast.
    precision = jax.lax.Precision.HIGHEST if cd == jnp.dtype(jnp.float32) else None

    # ---- row tile: MXU-filling, sublane aligned; avoid padding if possible --
    tm = max(8, min(tm, _round_up(M, 8)))
    tm = (tm // 8) * 8
    if M % tm != 0:
        # Prefer a multiple-of-8 tile that divides M exactly (no full-tensor
        # pad copy, no wasted padded-row MXU work); otherwise pad.
        cand = tm
        while cand >= 8 and M % cand != 0:
            cand -= 8
        if cand >= 8:
            tm = cand
    M_pad = _round_up(M, tm)
    if M_pad != M:
        x2d = jnp.pad(x2d, ((0, M_pad - M), (0, 0)))
    m_tiles = M_pad // tm

    # ---- VMEM footprint / path selection ------------------------------------
    itemsize = cd.itemsize
    out_itemsize = jnp.dtype(out_dtype).itemsize
    x_tile_b = tm * E * itemsize
    o_tile_b = tm * E * out_itemsize
    w_full_b = (E * H + H * E) * itemsize + (H + E) * 4
    resident_fp = 2 * (x_tile_b + o_tile_b + w_full_b) + (2 << 20)

    if weight_resident is None:
        weight_resident = resident_fp <= vmem_budget_bytes

    def _limit(footprint):
        return int(min(112 << 20, max(32 << 20, int(footprint * 1.25) + (4 << 20))))

    if weight_resident:
        kernel = functools.partial(mlp_kernel_resident, precision=precision,
                                   gelu_approximate=gelu_approximate)
        out2d = pl.pallas_call(
            kernel,
            out_shape=jax.ShapeDtypeStruct((M_pad, E), out_dtype),
            grid_spec=pltpu.PrefetchScalarGridSpec(
                num_scalar_prefetch=0,
                grid=(m_tiles,),
                in_specs=[
                    pl.BlockSpec((tm, E), lambda i: (i, 0)),   # x rows
                    pl.BlockSpec((E, H), lambda i: (0, 0)),    # W1 (resident)
                    pl.BlockSpec((1, H), lambda i: (0, 0)),    # b1 (resident)
                    pl.BlockSpec((H, E), lambda i: (0, 0)),    # W2 (resident)
                    pl.BlockSpec((1, E), lambda i: (0, 0)),    # b2 (resident)
                ],
                out_specs=pl.BlockSpec((tm, E), lambda i: (i, 0)),
            ),
            compiler_params=pltpu.CompilerParams(
                dimension_semantics=("parallel",),
                vmem_limit_bytes=_limit(resident_fp),
            ),
        )(x2d, w1c, b1f, w2c, b2f)
    else:
        # Hidden tile: lane-aligned divisor of H, else whole H.
        th = min(th, H)
        if H % th != 0:
            cand = (th // 128) * 128
            while cand >= 128 and H % cand != 0:
                cand -= 128
            th = cand if cand >= 128 else H
        k_tiles = H // th
        tile_fp = (2 * (x_tile_b + o_tile_b
                        + (E * th + th * E) * itemsize + (th + E) * 4)
                   + tm * E * 4)
        kernel = functools.partial(mlp_kernel_tiled, precision=precision,
                                   gelu_approximate=gelu_approximate)
        out2d = pl.pallas_call(
            kernel,
            out_shape=jax.ShapeDtypeStruct((M_pad, E), out_dtype),
            grid_spec=pltpu.PrefetchScalarGridSpec(
                num_scalar_prefetch=0,
                grid=(m_tiles, k_tiles),
                in_specs=[
                    pl.BlockSpec((tm, E), lambda i, k: (i, 0)),   # x rows
                    pl.BlockSpec((E, th), lambda i, k: (0, k)),   # W1 slice
                    pl.BlockSpec((1, th), lambda i, k: (0, k)),   # b1 slice
                    pl.BlockSpec((th, E), lambda i, k: (k, 0)),   # W2 slice
                    pl.BlockSpec((1, E), lambda i, k: (0, 0)),    # b2
                ],
                out_specs=pl.BlockSpec((tm, E), lambda i, k: (i, 0)),
                scratch_shapes=[pltpu.VMEM((tm, E), jnp.float32)],
            ),
            compiler_params=pltpu.CompilerParams(
                dimension_semantics=("parallel", "arbitrary"),
                vmem_limit_bytes=_limit(tile_fp),
            ),
        )(x2d, w1c, b1f, w2c, b2f)

    return out2d[:M].reshape(B, T, E)


def mlp_ref(x, w1, b1, w2, b2):
    hp = jax.lax.Precision.HIGHEST
    h = jnp.dot(x, w1, precision=hp) + b1[0]
    h = 0.5 * h * (1.0 + jax.lax.erf(h * jnp.float32(1.0 / math.sqrt(2.0))))
    return jnp.dot(h, w2, precision=hp) + b2[0]


if __name__ == "__main__":
    # Small but lane-dense shapes consistent with the module: n_embed=128
    # (hidden=512), batch=2, seq=8.
    B, T, E = 2, 8, 128
    H = 4 * E

    key = jax.random.PRNGKey(0)
    kx, k1, k2, k3, k4 = jax.random.split(key, 5)

    # Deterministic init mimicking nn.Linear (uniform +-1/sqrt(fan_in)).
    x = jax.random.normal(kx, (B, T, E), dtype=jnp.float32)
    bound1 = 1.0 / math.sqrt(E)
    w1 = jax.random.uniform(k1, (E, H), jnp.float32, -bound1, bound1)
    b1 = jax.random.uniform(k2, (1, H), jnp.float32, -bound1, bound1)
    bound2 = 1.0 / math.sqrt(H)
    w2 = jax.random.uniform(k3, (H, E), jnp.float32, -bound2, bound2)
    b2 = jax.random.uniform(k4, (1, E), jnp.float32, -bound2, bound2)

    ref = mlp_ref(x, w1, b1, w2, b2)

    # (1) Default fast path: bf16 MXU operands, f32 accumulation, weights
    #     VMEM-resident (1-D grid over row tiles).
    out_bf16 = jax.block_until_ready(mlp_pallas(x, w1, b1, w2, b2))
    assert out_bf16.shape == (B, T, E)
    assert out_bf16.dtype == x.dtype
    assert jnp.allclose(out_bf16, ref, atol=2e-2, rtol=2e-2), "bf16 path mismatch"

    # (2) Full-precision path: f32 operands (Precision.HIGHEST), hidden-dim
    #     tiled accumulator kernel exercised explicitly (th=256 => 2 K-steps).
    out_f32 = jax.block_until_ready(
        mlp_pallas(x, w1, b1, w2, b2, compute_dtype=jnp.float32,
                   weight_resident=False, th=256))
    assert out_f32.shape == (B, T, E)
    assert jnp.allclose(out_f32, ref, atol=1e-4, rtol=1e-4), "f32 path mismatch"

    print("KERNEL_OK")
</pallas_src>

<mosaic_0001>
module attributes {stable_mosaic.version = 11 : i64} {
  func.func @mlp_kernel_resident(%arg0: i32, %arg1: memref<16x128xbf16, #tpu.memory_space<vmem>>, %arg2: memref<128x512xbf16, #tpu.memory_space<vmem>>, %arg3: memref<1x512xf32, #tpu.memory_space<vmem>>, %arg4: memref<512x128xbf16, #tpu.memory_space<vmem>>, %arg5: memref<1x128xf32, #tpu.memory_space<vmem>>, %arg6: memref<16x128xf32, #tpu.memory_space<vmem>>) attributes {dimension_semantics = [#tpu.dimension_semantics<parallel>], iteration_bounds = array<i64: 1>, scalar_prefetch = 0 : i64, scratch_operands = 0 : i64, tpu.core_type = #tpu.core_type<tc>, window_params = [{transform_indices = @transform_0, window_bounds = array<i64: 16, 128>}, {pipeline_mode = #tpu.pipeline_mode<synchronous>, transform_indices = @transform_1, window_bounds = array<i64: 128, 512>}, {pipeline_mode = #tpu.pipeline_mode<synchronous>, transform_indices = @transform_2, window_bounds = array<i64: 1, 512>}, {pipeline_mode = #tpu.pipeline_mode<synchronous>, transform_indices = @transform_3, window_bounds = array<i64: 512, 128>}, {pipeline_mode = #tpu.pipeline_mode<synchronous>, transform_indices = @transform_4, window_bounds = array<i64: 1, 128>}, {transform_indices = @transform_5, window_bounds = array<i64: 16, 128>}]} {
    %c0 = arith.constant 0 : index
    %c0_0 = arith.constant 0 : index
    %0 = vector.load %arg1[%c0, %c0_0] : memref<16x128xbf16, #tpu.memory_space<vmem>>, vector<16x128xbf16>
    %c0_1 = arith.constant 0 : index
    %c0_2 = arith.constant 0 : index
    %1 = vector.load %arg2[%c0_1, %c0_2] : memref<128x512xbf16, #tpu.memory_space<vmem>>, vector<128x512xbf16>
    %cst = arith.constant dense<0.000000e+00> : vector<16x512xf32>
    %2 = tpu.matmul %0, %1, %cst {dimension_numbers = #tpu.dot_dimension_numbers<[1], [0], [0], [1], [0, 0, 1, 1], [], []>} : vector<16x128xbf16>, vector<128x512xbf16>, vector<16x512xf32> -> vector<16x512xf32>
    %c0_3 = arith.constant 0 : index
    %c0_4 = arith.constant 0 : index
    %3 = vector.load %arg3[%c0_3, %c0_4] : memref<1x512xf32, #tpu.memory_space<vmem>>, vector<1x512xf32>
    %4 = vector.broadcast %3 : vector<1x512xf32> to vector<16x512xf32>
    %5 = arith.addf %2, %4 : vector<16x512xf32>
    %cst_5 = arith.constant 5.000000e-01 : f32
    %6 = vector.broadcast %cst_5 : f32 to vector<16x512xf32>
    %7 = arith.mulf %6, %5 : vector<16x512xf32>
    %cst_6 = arith.constant 0.707106769 : f32
    %8 = vector.broadcast %cst_6 : f32 to vector<16x512xf32>
    %9 = arith.mulf %5, %8 : vector<16x512xf32>
    %10 = math.erf %9 : vector<16x512xf32>
    %cst_7 = arith.constant 1.000000e+00 : f32
    %11 = vector.broadcast %cst_7 : f32 to vector<16x512xf32>
    %12 = arith.addf %11, %10 : vector<16x512xf32>
    %13 = arith.mulf %7, %12 : vector<16x512xf32>
    %14 = arith.truncf %13 : vector<16x512xf32> to vector<16x512xbf16>
    %c0_8 = arith.constant 0 : index
    %c0_9 = arith.constant 0 : index
    %15 = vector.load %arg4[%c0_8, %c0_9] : memref<512x128xbf16, #tpu.memory_space<vmem>>, vector<512x128xbf16>
    %cst_10 = arith.constant dense<0.000000e+00> : vector<16x128xf32>
    %16 = tpu.matmul %14, %15, %cst_10 {dimension_numbers = #tpu.dot_dimension_numbers<[1], [0], [0], [1], [0, 0, 1, 1], [], []>} : vector<16x512xbf16>, vector<512x128xbf16>, vector<16x128xf32> -> vector<16x128xf32>
    %c0_11 = arith.constant 0 : index
    %c0_12 = arith.constant 0 : index
    %17 = vector.load %arg5[%c0_11, %c0_12] : memref<1x128xf32, #tpu.memory_space<vmem>>, vector<1x128xf32>
    %18 = vector.broadcast %17 : vector<1x128xf32> to vector<16x128xf32>
    %19 = arith.addf %16, %18 : vector<16x128xf32>
    %c0_13 = arith.constant 0 : index
    %c0_14 = arith.constant 0 : index
    %20 = vector.load %arg6[%c0_13, %c0_14] : memref<16x128xf32, #tpu.memory_space<vmem>>, vector<16x128xf32>
    tpu.vector_store %arg6[%c0_13, %c0_14], %19 {strides = array<i32>} : memref<16x128xf32, #tpu.memory_space<vmem>>, vector<16x128xf32>,
    return
  }
  func.func @transform_0(%arg0: i32) -> (i32, i32) {
    %c0_i32 = arith.constant 0 : i32
    %c0_i32_0 = arith.constant 0 : i32
    return %arg0, %c0_i32 : i32, i32
  }
  func.func @transform_1(%arg0: i32) -> (i32, i32) {
    %c0_i32 = arith.constant 0 : i32
    %c0_i32_0 = arith.constant 0 : i32
    %c0_i32_1 = arith.constant 0 : i32
    return %c0_i32, %c0_i32_0 : i32, i32
  }
  func.func @transform_2(%arg0: i32) -> (i32, i32) {
    %c0_i32 = arith.constant 0 : i32
    %c0_i32_0 = arith.constant 0 : i32
    %c0_i32_1 = arith.constant 0 : i32
    return %c0_i32, %c0_i32_0 : i32, i32
  }
  func.func @transform_3(%arg0: i32) -> (i32, i32) {
    %c0_i32 = arith.constant 0 : i32
    %c0_i32_0 = arith.constant 0 : i32
    %c0_i32_1 = arith.constant 0 : i32
    return %c0_i32, %c0_i32_0 : i32, i32
  }
  func.func @transform_4(%arg0: i32) -> (i32, i32) {
    %c0_i32 = arith.constant 0 : i32
    %c0_i32_0 = arith.constant 0 : i32
    %c0_i32_1 = arith.constant 0 : i32
    return %c0_i32, %c0_i32_0 : i32, i32
  }
  func.func @transform_5(%arg0: i32) -> (i32, i32) {
    %c0_i32 = arith.constant 0 : i32
    %c0_i32_0 = arith.constant 0 : i32
    return %arg0, %c0_i32 : i32, i32
  }
}

</mosaic_0001>

<llo_original>
// kernel: tpu_custom_call.1
$region0: #{tpu_custom_call.1}
  #allocation0 [shape = 'u32[]', space=smem, size = 0x4, offset = 0x4, fixed_abs, tag = 'smem constant byte address 0x4 - core index']
  #allocation1 [shape = 'u32[72,128]{1,0:T(1,128)}', space=vmem, size = 0x9000, scoped, tag = 'internal scratch']
  %s0 = inlined_call_operand.hbm [shape: bf16[16,128], index: 0, kind: input, shape index: {}]
  %s1 = inlined_call_operand.hbm [shape: bf16[128,512], index: 1, kind: input, shape index: {}]
  %s2 = inlined_call_operand.hbm [shape: f32[1,512], index: 2, kind: input, shape index: {}]
  %s3 = inlined_call_operand.hbm [shape: bf16[512,128], index: 3, kind: input, shape index: {}]
  %s4 = inlined_call_operand.vmem [shape: f32[1,128], index: 4, kind: input, shape index: {}]
  %s5 = inlined_call_operand.hbm [shape: f32[16,128], index: 5, kind: output, shape index: {}]
  %s6 = sld [smem:[#allocation0]]
  $region46: #{tpu_custom_call.1} parent=0
    _
  %s8 = ssub.s32 1, %s6
  %s9 = scalar_select 0, %s8, %s6
  $region1: #{tpu_custom_call.1} parent=0
    #allocation2 [shape = 'u8[4096]{0}', space=vmem, size = 0x1000, scoped, tag = 'input window, operand 0, single buffered']
    #allocation3 [shape = 's32[1]{0}', space=sflag, size = 0x4, scoped, tag = 'scoped memory for tpu_custom_call.1']
    #allocation4 [shape = 's32[1]{0}', space=sflag, size = 0x4, scoped, tag = 'scoped memory for tpu_custom_call.1']
    #allocation5 [shape = 'u8[131072]{0}', space=vmem, size = 0x20000, scoped, tag = 'input window, operand 1, single buffered']
    #allocation6 [shape = 's32[1]{0}', space=sflag, size = 0x4, scoped, tag = 'scoped memory for tpu_custom_call.1']
    #allocation7 [shape = 'u8[2048]{0}', space=vmem, size = 0x800, scoped, tag = 'input window, operand 2, single buffered']
    #allocation8 [shape = 'u8[131072]{0}', space=vmem, size = 0x20000, scoped, tag = 'input window, operand 3, single buffered']
    #allocation9 [shape = 's32[1]{0}', space=sflag, size = 0x4, scoped, tag = 'scoped memory for tpu_custom_call.1']
    #allocation10 [shape = 'u8[8192]{0}', space=vmem, size = 0x2000, scoped, tag = 'output window, operand 0, single buffered']
    %10 = vsyncpa [#allocation3], 0
    %11 = vsyncpa [#allocation6], 0
    %12 = vsyncpa [#allocation9], 0
    %13 = vsyncpa [#allocation4], 0
    // Predicated region
    $region2: #{tpu_custom_call.1} parent=1 // pred_check
      _
    $region3: #{tpu_custom_call.1} parent=1 // pred_check_branch
      %15 = sbr.rel (0) target = $region5
    $region4: #{tpu_custom_call.1} parent=1 // pred_region
      %17 = vsyncadd [#allocation3], 0
      %s18 = sshll.u32 %s0, 4
      %s19 = int_to_ptr.hbm [resolvable:$true] %s18
      %s20 = sshll.u32 [#allocation2], 4
      %s21 = int_to_ptr.vmem [resolvable:$true] %s20
      %26 = dma.hbm_to_vmem [thread:$0]  %s19, 128, %s21, [#allocation3], 64, 64, 4
    $region5: #{tpu_custom_call.1} parent=1 // pred_fallthru
      _
    // Predicated region
    $region6: #{tpu_custom_call.1} parent=1 // pred_check
      _
    $region7: #{tpu_custom_call.1} parent=1 // pred_check_branch
      %28 = sbr.rel (0) target = $region9
    $region8: #{tpu_custom_call.1} parent=1 // pred_region
      %30 = vsyncadd [#allocation6], 0
      %s31 = sshll.u32 %s1, 4
      %s32 = int_to_ptr.hbm [resolvable:$true] %s31
      %s33 = sshll.u32 [#allocation5], 4
      %s34 = int_to_ptr.vmem [resolvable:$true] %s33
      %39 = dma.hbm_to_vmem [thread:$0]  %s32, 4096, %s34, [#allocation6], 256, 256, 16
    $region9: #{tpu_custom_call.1} parent=1 // pred_fallthru
      _
    // Predicated region
    $region10: #{tpu_custom_call.1} parent=1 // pred_check
      _
    $region11: #{tpu_custom_call.1} parent=1 // pred_check_branch
      %41 = sbr.rel (0) target = $region13
    $region12: #{tpu_custom_call.1} parent=1 // pred_region
      %43 = vsyncadd [#allocation6], 0
      %s45 = sshll.u32 %s2, 4
      %s46 = int_to_ptr.hbm [resolvable:$true] %s45
      %s47 = sshll.u32 [#allocation7], 4
      %s48 = int_to_ptr.vmem [resolvable:$true] %s47
      %50 = dma.hbm_to_vmem [thread:$0]  %s46, 64, %s48, [#allocation6]
    $region13: #{tpu_custom_call.1} parent=1 // pred_fallthru
      _
    // Predicated region
    $region14: #{tpu_custom_call.1} parent=1 // pred_check
      _
    $region15: #{tpu_custom_call.1} parent=1 // pred_check_branch
      %52 = sbr.rel (0) target = $region17
    $region16: #{tpu_custom_call.1} parent=1 // pred_region
      %54 = vsyncadd [#allocation9], 0
      %s55 = sshll.u32 %s3, 4
      %s56 = int_to_ptr.hbm [resolvable:$true] %s55
      %s57 = sshll.u32 [#allocation8], 4
      %s58 = int_to_ptr.vmem [resolvable:$true] %s57
      %63 = dma.hbm_to_vmem [thread:$0]  %s56, 4096, %s58, [#allocation9], 64, 64, 4
    $region17: #{tpu_custom_call.1} parent=1 // pred_fallthru
      _
    // Predicated region
    $region18: #{tpu_custom_call.1} parent=1 // pred_check
      _
    $region19: #{tpu_custom_call.1} parent=1 // pred_check_branch
      %65 = sbr.rel (0) target = $region21
    $region20: #{tpu_custom_call.1} parent=1 // pred_region
      _
    $region21: #{tpu_custom_call.1} parent=1 // pred_fallthru
      _
    // Predicated region
    $region22: #{tpu_custom_call.1} parent=1 // pred_check
      _
    $region23: #{tpu_custom_call.1} parent=1 // pred_check_branch
      %67 = sbr.rel (0) target = $region25
    $region24: #{tpu_custom_call.1} parent=1 // pred_region
      %69 = dma.done [#allocation3], 128
    $region25: #{tpu_custom_call.1} parent=1 // pred_fallthru
      _
    // Predicated region
    $region26: #{tpu_custom_call.1} parent=1 // pred_check
      _
    $region27: #{tpu_custom_call.1} parent=1 // pred_check_branch
      %71 = sbr.rel (0) target = $region29
    $region28: #{tpu_custom_call.1} parent=1 // pred_region
      %73 = dma.done [#allocation6], 4096
    $region29: #{tpu_custom_call.1} parent=1 // pred_fallthru
      _
    // Predicated region
    $region30: #{tpu_custom_call.1} parent=1 // pred_check
      _
    $region31: #{tpu_custom_call.1} parent=1 // pred_check_branch
      %75 = sbr.rel (0) target = $region33
    $region32: #{tpu_custom_call.1} parent=1 // pred_region
      %77 = dma.done [#allocation6], 64
    $region33: #{tpu_custom_call.1} parent=1 // pred_fallthru
      _
    // Predicated region
    $region34: #{tpu_custom_call.1} parent=1 // pred_check
      _
    $region35: #{tpu_custom_call.1} parent=1 // pred_check_branch
      %79 = sbr.rel (0) target = $region37
    $region36: #{tpu_custom_call.1} parent=1 // pred_region
      %81 = dma.done [#allocation9], 4096
    $region37: #{tpu_custom_call.1} parent=1 // pred_fallthru
      _
    %v82 = vld [vmem:[#allocation2] sm:$0xf]
    %v83 = vld [vmem:[#allocation2 + $0x4] sm:$0xf]
    %v84 = vld [vmem:[#allocation5] sm:$0xff]
    %v85 = vld [vmem:[#allocation5 + $0x8] sm:$0xff]
    %v86 = vld [vmem:[#allocation5 + $0x10] sm:$0xff]
    %v87 = vld [vmem:[#allocation5 + $0x18] sm:$0xff]
    %v88 = vld [vmem:[#allocation5 + $0x20] sm:$0xff]
    %v89 = vld [vmem:[#allocation5 + $0x28] sm:$0xff]
    %v90 = vld [vmem:[#allocation5 + $0x30] sm:$0xff]
    %v91 = vld [vmem:[#allocation5 + $0x38] sm:$0xff]
    %v92 = vld [vmem:[#allocation5 + $0x40] sm:$0xff]
    %v93 = vld [vmem:[#allocation5 + $0x48] sm:$0xff]
    %v94 = vld [vmem:[#allocation5 + $0x50] sm:$0xff]
    %v95 = vld [vmem:[#allocation5 + $0x58] sm:$0xff]
    %v96 = vld [vmem:[#allocation5 + $0x60] sm:$0xff]
    %v97 = vld [vmem:[#allocation5 + $0x68] sm:$0xff]
    %v98 = vld [vmem:[#allocation5 + $0x70] sm:$0xff]
    %v99 = vld [vmem:[#allocation5 + $0x78] sm:$0xff]
    %v100 = vld [vmem:[#allocation5 + $0x80] sm:$0xff]
    %v101 = vld [vmem:[#allocation5 + $0x88] sm:$0xff]
    %v102 = vld [vmem:[#allocation5 + $0x90] sm:$0xff]
    %v103 = vld [vmem:[#allocation5 + $0x98] sm:$0xff]
    %v104 = vld [vmem:[#allocation5 + $0xa0] sm:$0xff]
    %v105 = vld [vmem:[#allocation5 + $0xa8] sm:$0xff]
    %v106 = vld [vmem:[#allocation5 + $0xb0] sm:$0xff]
    %v107 = vld [vmem:[#allocation5 + $0xb8] sm:$0xff]
    %v108 = vld [vmem:[#allocation5 + $0xc0] sm:$0xff]
    %v109 = vld [vmem:[#allocation5 + $0xc8] sm:$0xff]
    %v110 = vld [vmem:[#allocation5 + $0xd0] sm:$0xff]
    %v111 = vld [vmem:[#allocation5 + $0xd8] sm:$0xff]
    %v112 = vld [vmem:[#allocation5 + $0xe0] sm:$0xff]
    %v113 = vld [vmem:[#allocation5 + $0xe8] sm:$0xff]
    %v114 = vld [vmem:[#allocation5 + $0xf0] sm:$0xff]
    %v115 = vld [vmem:[#allocation5 + $0xf8] sm:$0xff]
    %v116 = vld [vmem:[#allocation7] sm:$0xf]
    %v118 = vperm.slane %v116, 0
    %v119 = vperm.slane %v116, 1
    %v120 = vperm.slane %v116, 2
    %v121 = vperm.slane %v116, 3
    %v128 = vunpack.c.l.b16 %v82
    %v129 = vunpack.c.l.b16 %v83
    %v130 = vpack.c.b16 %v129, %v128
    %v164 = vunpack.c.l.b16 %v84
    %v165 = vunpack.c.h.b16 %v84
    %v166 = vunpack.c.l.b16 %v85
    %v167 = vunpack.c.h.b16 %v85
    %v168 = vunpack.c.l.b16 %v86
    %v169 = vunpack.c.h.b16 %v86
    %v170 = vunpack.c.l.b16 %v87
    %v171 = vunpack.c.h.b16 %v87
    %v172 = vunpack.c.l.b16 %v88
    %v173 = vunpack.c.h.b16 %v88
    %v174 = vunpack.c.l.b16 %v89
    %v175 = vunpack.c.h.b16 %v89
    %v176 = vunpack.c.l.b16 %v90
    %v177 = vunpack.c.h.b16 %v90
    %v178 = vunpack.c.l.b16 %v91
    %v179 = vunpack.c.h.b16 %v91
    %v180 = vunpack.c.l.b16 %v92
    %v181 = vunpack.c.h.b16 %v92
    %v182 = vunpack.c.l.b16 %v93
    %v183 = vunpack.c.h.b16 %v93
    %v184 = vunpack.c.l.b16 %v94
    %v185 = vunpack.c.h.b16 %v94
    %v186 = vunpack.c.l.b16 %v95
    %v187 = vunpack.c.h.b16 %v95
    %v188 = vunpack.c.l.b16 %v96
    %v189 = vunpack.c.h.b16 %v96
    %v190 = vunpack.c.l.b16 %v97
    %v191 = vunpack.c.h.b16 %v97
    %v192 = vunpack.c.l.b16 %v98
    %v193 = vunpack.c.h.b16 %v98
    %v194 = vunpack.c.l.b16 %v99
    %v195 = vunpack.c.h.b16 %v99
    %v196 = vunpack.c.l.b16 %v100
    %v197 = vunpack.c.h.b16 %v100
    %v198 = vunpack.c.l.b16 %v101
    %v199 = vunpack.c.h.b16 %v101
    %v200 = vunpack.c.l.b16 %v102
    %v201 = vunpack.c.h.b16 %v102
    %v202 = vunpack.c.l.b16 %v103
    %v203 = vunpack.c.h.b16 %v103
    %v204 = vunpack.c.l.b16 %v104
    %v205 = vunpack.c.h.b16 %v104
    %v206 = vunpack.c.l.b16 %v105
    %v207 = vunpack.c.h.b16 %v105
    %v208 = vunpack.c.l.b16 %v106
    %v209 = vunpack.c.h.b16 %v106
    %v210 = vunpack.c.l.b16 %v107
    %v211 = vunpack.c.h.b16 %v107
    %v212 = vunpack.c.l.b16 %v108
    %v213 = vunpack.c.h.b16 %v108
    %v214 = vunpack.c.l.b16 %v109
    %v215 = vunpack.c.h.b16 %v109
    %v216 = vunpack.c.l.b16 %v110
    %v217 = vunpack.c.h.b16 %v110
    %v218 = vunpack.c.l.b16 %v111
    %v219 = vunpack.c.h.b16 %v111
    %v220 = vunpack.c.l.b16 %v112
    %v221 = vunpack.c.h.b16 %v112
    %v222 = vunpack.c.l.b16 %v113
    %v223 = vunpack.c.h.b16 %v113
    %v224 = vunpack.c.l.b16 %v114
    %v225 = vunpack.c.h.b16 %v114
    %v226 = vunpack.c.l.b16 %v115
    %v227 = vunpack.c.h.b16 %v115
    %v228 = vpack.c.b16 %v168, %v164
    %v229 = vpack.c.b16 %v169, %v165
    %v230 = vpack.c.b16 %v170, %v166
    %v231 = vpack.c.b16 %v171, %v167
    %v232 = vpack.c.b16 %v176, %v172
    %v233 = vpack.c.b16 %v177, %v173
    %v234 = vpack.c.b16 %v178, %v174
    %v235 = vpack.c.b16 %v179, %v175
    %v236 = vpack.c.b16 %v184, %v180
    %v237 = vpack.c.b16 %v185, %v181
    %v238 = vpack.c.b16 %v186, %v182
    %v239 = vpack.c.b16 %v187, %v183
    %v240 = vpack.c.b16 %v192, %v188
    %v241 = vpack.c.b16 %v193, %v189
    %v242 = vpack.c.b16 %v194, %v190
    %v243 = vpack.c.b16 %v195, %v191
    %v244 = vpack.c.b16 %v200, %v196
    %v245 = vpack.c.b16 %v201, %v197
    %v246 = vpack.c.b16 %v202, %v198
    %v247 = vpack.c.b16 %v203, %v199
    %v248 = vpack.c.b16 %v208, %v204
    %v249 = vpack.c.b16 %v209, %v205
    %v250 = vpack.c.b16 %v210, %v206
    %v251 = vpack.c.b16 %v211, %v207
    %v252 = vpack.c.b16 %v216, %v212
    %v253 = vpack.c.b16 %v217, %v213
    %v254 = vpack.c.b16 %v218, %v214
    %v255 = vpack.c.b16 %v219, %v215
    %v256 = vpack.c.b16 %v224, %v220
    %v257 = vpack.c.b16 %v225, %v221
    %v258 = vpack.c.b16 %v226, %v222
    %v259 = vpack.c.b16 %v227, %v223
    %292 = vmatpush.bf16.msra.mxu0 %v256
    %293 = vmatpush.bf16.msra.mxu0 %v252
    %294 = vmatpush.bf16.msra.mxu0 %v248
    %295 = vmatpush.bf16.msra.mxu0 %v244
    %296 = vmatpush.bf16.msra.mxu0 %v240
    %297 = vmatpush.bf16.msra.mxu0 %v236
    %298 = vmatpush.bf16.msra.mxu0 %v232
    %299 = vmatpush.bf16.msra.mxu0 %v228
    %300 = vmatmul.bf16.gmra.mxu0 %v130
    %v301 = vpop.f32.mrf.mxu0
    %v302 = vadd.f32 %v118, %v301
    %v303 = vpop.f32.mrf.mxu0
    %v304 = vadd.f32 %v118, %v303
    %305 = vdwg.mxu0
    %306 = vmatpush.bf16.msra.mxu0 %v257
    %307 = vmatpush.bf16.msra.mxu0 %v253
    %308 = vmatpush.bf16.msra.mxu0 %v249
    %309 = vmatpush.bf16.msra.mxu0 %v245
    %310 = vmatpush.bf16.msra.mxu0 %v241
    %311 = vmatpush.bf16.msra.mxu0 %v237
    %312 = vmatpush.bf16.msra.mxu0 %v233
    %313 = vmatpush.bf16.msra.mxu0 %v229
    %314 = vmatmul.bf16.gmra.mxu0 %v130
    %v315 = vpop.f32.mrf.mxu0
    %v316 = vadd.f32 %v119, %v315
    %v317 = vpop.f32.mrf.mxu0
    %v318 = vadd.f32 %v119, %v317
    %319 = vdwg.mxu0
    %320 = vmatpush.bf16.msra.mxu0 %v258
    %321 = vmatpush.bf16.msra.mxu0 %v254
    %322 = vmatpush.bf16.msra.mxu0 %v250
    %323 = vmatpush.bf16.msra.mxu0 %v246
    %324 = vmatpush.bf16.msra.mxu0 %v242
    %325 = vmatpush.bf16.msra.mxu0 %v238
    %326 = vmatpush.bf16.msra.mxu0 %v234
    %327 = vmatpush.bf16.msra.mxu0 %v230
    %328 = vmatmul.bf16.gmra.mxu0 %v130
    %v329 = vpop.f32.mrf.mxu0
    %v330 = vadd.f32 %v120, %v329
    %v331 = vpop.f32.mrf.mxu0
    %v332 = vadd.f32 %v120, %v331
    %333 = vdwg.mxu0
    %334 = vmatpush.bf16.msra.mxu0 %v259
    %335 = vmatpush.bf16.msra.mxu0 %v255
    %336 = vmatpush.bf16.msra.mxu0 %v251
    %337 = vmatpush.bf16.msra.mxu0 %v247
    %338 = vmatpush.bf16.msra.mxu0 %v243
    %339 = vmatpush.bf16.msra.mxu0 %v239
    %340 = vmatpush.bf16.msra.mxu0 %v235
    %341 = vmatpush.bf16.msra.mxu0 %v231
    %342 = vmatmul.bf16.gmra.mxu0 %v130
    %v343 = vpop.f32.mrf.mxu0
    %v344 = vadd.f32 %v121, %v343
    %v345 = vpop.f32.mrf.mxu0
    %v346 = vadd.f32 %v121, %v345
    %347 = vdwg.mxu0
    %v348 = vmul.f32 %v302, 0.5
    %v349 = vmul.f32 %v316, 0.5
    %v350 = vmul.f32 %v330, 0.5
    %v351 = vmul.f32 %v344, 0.5
    %v352 = vmul.f32 %v304, 0.5
    %v353 = vmul.f32 %v318, 0.5
    %v354 = vmul.f32 %v332, 0.5
    %v355 = vmul.f32 %v346, 0.5
    %v356 = vmul.f32 %v302, 0.70710677
    %v357 = vmul.f32 %v316, 0.70710677
    %v358 = vmul.f32 %v330, 0.70710677
    %v359 = vmul.f32 %v344, 0.70710677
    %v360 = vmul.f32 %v304, 0.70710677
    %v361 = vmul.f32 %v318, 0.70710677
    %v362 = vmul.f32 %v332, 0.70710677
    %v363 = vmul.f32 %v346, 0.70710677
    %v364 = vmul.f32 %v356, %v356
    %v365 = vmin.f32 16.0, %v364
    %v366 = vmul.f32 %v365, 2.1237322e-06
    %v367 = vadd.f32 %v366, 0.00028619796
    %v368 = vmul.f32 %v365, %v367
    %v369 = vadd.f32 %v368, 0.0036580483
    %v370 = vmul.f32 %v365, %v369
    %v371 = vadd.f32 %v370, 0.05243302
    %v372 = vmul.f32 %v365, %v371
    %v373 = vadd.f32 %v372, 0.18741608
    %v374 = vmul.f32 %v365, %v373
    %v375 = vadd.f32 %v374, 1.1283791
    %v376 = vmul.f32 %v356, %v375
    %v377 = vmul.f32 %v365, 3.8918573e-05
    %v378 = vadd.f32 %v377, 0.001143296
    %v379 = vmul.f32 %v365, %v378
    %v380 = vadd.f32 %v379, 0.014752088
    %v381 = vmul.f32 %v365, %v380
    %v382 = vadd.f32 %v381, 0.112945676
    %v383 = vmul.f32 %v365, %v382
    %v384 = vadd.f32 %v383, 0.4994258
    %v385 = vmul.f32 %v365, %v384
    %v386 = vadd.f32 %v385, 1.0
    %v387 = vrcp.pop %v386
    %v388 = vmul.f32 %v386, %v387
    %v389 = vsub.f32 1.0, %v388
    %v390 = vmul.f32 %v387, %v389
    %v391 = vadd.f32 %v387, %v390
    %vm392 = vweird.f32 %v386
    %vm393 = vweird.f32 %v387
    %vm394 = vmor %vm392, %vm393
    %v395 = vsel %vm394, %v387, %v391
    %v396 = vand.u32 2147483647, %v386
    %vm397 = vcmp.eq.f32.partialorder %v396, 8.507059e+37
    %v398 = vand.u32 %v386, 2147483648
    %v399 = vor.u32 1.1754944e-38, %v398
    %v400 = vsel %vm397, %v399, %v395
    %v401 = vmul.f32 %v376, %v400
    %v402 = vmin.f32 %v401, 1.0
    %v403 = vmax.f32 %v402, -1.0
    %v404 = vmul.f32 %v357, %v357
    %v405 = vmin.f32 16.0, %v404
    %v406 = vmul.f32 %v405, 2.1237322e-06
    %v407 = vadd.f32 %v406, 0.00028619796
    %v408 = vmul.f32 %v405, %v407
    %v409 = vadd.f32 %v408, 0.0036580483
    %v410 = vmul.f32 %v405, %v409
    %v411 = vadd.f32 %v410, 0.05243302
    %v412 = vmul.f32 %v405, %v411
    %v413 = vadd.f32 %v412, 0.18741608
    %v414 = vmul.f32 %v405, %v413
    %v415 = vadd.f32 %v414, 1.1283791
    %v416 = vmul.f32 %v357, %v415
    %v417 = vmul.f32 %v405, 3.8918573e-05
    %v418 = vadd.f32 %v417, 0.001143296
    %v419 = vmul.f32 %v405, %v418
    %v420 = vadd.f32 %v419, 0.014752088
    %v421 = vmul.f32 %v405, %v420
    %v422 = vadd.f32 %v421, 0.112945676
    %v423 = vmul.f32 %v405, %v422
    %v424 = vadd.f32 %v423, 0.4994258
    %v425 = vmul.f32 %v405, %v424
    %v426 = vadd.f32 %v425, 1.0
    %v427 = vrcp.pop %v426
    %v428 = vmul.f32 %v426, %v427
    %v429 = vsub.f32 1.0, %v428
    %v430 = vmul.f32 %v427, %v429
    %v431 = vadd.f32 %v427, %v430
    %vm432 = vweird.f32 %v426
    %vm433 = vweird.f32 %v427
    %vm434 = vmor %vm432, %vm433
    %v435 = vsel %vm434, %v427, %v431
    %v436 = vand.u32 2147483647, %v426
    %vm437 = vcmp.eq.f32.partialorder %v436, 8.507059e+37
    %v438 = vand.u32 %v426, 2147483648
    %v439 = vor.u32 1.1754944e-38, %v438
    %v440 = vsel %vm437, %v439, %v435
    %v441 = vmul.f32 %v416, %v440
    %v442 = vmin.f32 %v441, 1.0
    %v443 = vmax.f32 %v442, -1.0
    %v444 = vmul.f32 %v358, %v358
    %v445 = vmin.f32 16.0, %v444
    %v446 = vmul.f32 %v445, 2.1237322e-06
    %v447 = vadd.f32 %v446, 0.00028619796
    %v448 = vmul.f32 %v445, %v447
    %v449 = vadd.f32 %v448, 0.0036580483
    %v450 = vmul.f32 %v445, %v449
    %v451 = vadd.f32 %v450, 0.05243302
    %v452 = vmul.f32 %v445, %v451
    %v453 = vadd.f32 %v452, 0.18741608
    %v454 = vmul.f32 %v445, %v453
    %v455 = vadd.f32 %v454, 1.1283791
    %v456 = vmul.f32 %v358, %v455
    %v457 = vmul.f32 %v445, 3.8918573e-05
    %v458 = vadd.f32 %v457, 0.001143296
    %v459 = vmul.f32 %v445, %v458
    %v460 = vadd.f32 %v459, 0.014752088
    %v461 = vmul.f32 %v445, %v460
    %v462 = vadd.f32 %v461, 0.112945676
    %v463 = vmul.f32 %v445, %v462
    %v464 = vadd.f32 %v463, 0.4994258
    %v465 = vmul.f32 %v445, %v464
    %v466 = vadd.f32 %v465, 1.0
    %v467 = vrcp.pop %v466
    %v468 = vmul.f32 %v466, %v467
    %v469 = vsub.f32 1.0, %v468
    %v470 = vmul.f32 %v467, %v469
    %v471 = vadd.f32 %v467, %v470
    %vm472 = vweird.f32 %v466
    %vm473 = vweird.f32 %v467
    %vm474 = vmor %vm472, %vm473
    %v475 = vsel %vm474, %v467, %v471
    %v476 = vand.u32 2147483647, %v466
    %vm477 = vcmp.eq.f32.partialorder %v476, 8.507059e+37
    %v478 = vand.u32 %v466, 2147483648
    %v479 = vor.u32 1.1754944e-38, %v478
    %v480 = vsel %vm477, %v479, %v475
    %v481 = vmul.f32 %v456, %v480
    %v482 = vmin.f32 %v481, 1.0
    %v483 = vmax.f32 %v482, -1.0
    %v484 = vmul.f32 %v359, %v359
    %v485 = vmin.f32 16.0, %v484
    %v486 = vmul.f32 %v485, 2.1237322e-06
    %v487 = vadd.f32 %v486, 0.00028619796
    %v488 = vmul.f32 %v485, %v487
    %v489 = vadd.f32 %v488, 0.0036580483
    %v490 = vmul.f32 %v485, %v489
    %v491 = vadd.f32 %v490, 0.05243302
    %v492 = vmul.f32 %v485, %v491
    %v493 = vadd.f32 %v492, 0.18741608
    %v494 = vmul.f32 %v485, %v493
    %v495 = vadd.f32 %v494, 1.1283791
    %v496 = vmul.f32 %v359, %v495
    %v497 = vmul.f32 %v485, 3.8918573e-05
    %v498 = vadd.f32 %v497, 0.001143296
    %v499 = vmul.f32 %v485, %v498
    %v500 = vadd.f32 %v499, 0.014752088
    %v501 = vmul.f32 %v485, %v500
    %v502 = vadd.f32 %v501, 0.112945676
    %v503 = vmul.f32 %v485, %v502
    %v504 = vadd.f32 %v503, 0.4994258
    %v505 = vmul.f32 %v485, %v504
    %v506 = vadd.f32 %v505, 1.0
    %v507 = vrcp.pop %v506
    %v508 = vmul.f32 %v506, %v507
    %v509 = vsub.f32 1.0, %v508
    %v510 = vmul.f32 %v507, %v509
    %v511 = vadd.f32 %v507, %v510
    %vm512 = vweird.f32 %v506
    %vm513 = vweird.f32 %v507
    %vm514 = vmor %vm512, %vm513
    %v515 = vsel %vm514, %v507, %v511
    %v516 = vand.u32 2147483647, %v506
    %vm517 = vcmp.eq.f32.partialorder %v516, 8.507059e+37
    %v518 = vand.u32 %v506, 2147483648
    %v519 = vor.u32 1.1754944e-38, %v518
    %v520 = vsel %vm517, %v519, %v515
    %v521 = vmul.f32 %v496, %v520
    %v522 = vmin.f32 %v521, 1.0
    %v523 = vmax.f32 %v522, -1.0
    %v524 = vmul.f32 %v360, %v360
    %v525 = vmin.f32 16.0, %v524
    %v526 = vmul.f32 %v525, 2.1237322e-06
    %v527 = vadd.f32 %v526, 0.00028619796
    %v528 = vmul.f32 %v525, %v527
    %v529 = vadd.f32 %v528, 0.0036580483
    %v530 = vmul.f32 %v525, %v529
    %v531 = vadd.f32 %v530, 0.05243302
    %v532 = vmul.f32 %v525, %v531
    %v533 = vadd.f32 %v532, 0.18741608
    %v534 = vmul.f32 %v525, %v533
    %v535 = vadd.f32 %v534, 1.1283791
    %v536 = vmul.f32 %v360, %v535
    %v537 = vmul.f32 %v525, 3.8918573e-05
    %v538 = vadd.f32 %v537, 0.001143296
    %v539 = vmul.f32 %v525, %v538
    %v540 = vadd.f32 %v539, 0.014752088
    %v541 = vmul.f32 %v525, %v540
    %v542 = vadd.f32 %v541, 0.112945676
    %v543 = vmul.f32 %v525, %v542
    %v544 = vadd.f32 %v543, 0.4994258
    %v545 = vmul.f32 %v525, %v544
    %v546 = vadd.f32 %v545, 1.0
    %v547 = vrcp.pop %v546
    %v548 = vmul.f32 %v546, %v547
    %v549 = vsub.f32 1.0, %v548
    %v550 = vmul.f32 %v547, %v549
    %v551 = vadd.f32 %v547, %v550
    %vm552 = vweird.f32 %v546
    %vm553 = vweird.f32 %v547
    %vm554 = vmor %vm552, %vm553
    %v555 = vsel %vm554, %v547, %v551
    %v556 = vand.u32 2147483647, %v546
    %vm557 = vcmp.eq.f32.partialorder %v556, 8.507059e+37
    %v558 = vand.u32 %v546, 2147483648
    %v559 = vor.u32 1.1754944e-38, %v558
    %v560 = vsel %vm557, %v559, %v555
    %v561 = vmul.f32 %v536, %v560
    %v562 = vmin.f32 %v561, 1.0
    %v563 = vmax.f32 %v562, -1.0
    %v564 = vmul.f32 %v361, %v361
    %v565 = vmin.f32 16.0, %v564
    %v566 = vmul.f32 %v565, 2.1237322e-06
    %v567 = vadd.f32 %v566, 0.00028619796
    %v568 = vmul.f32 %v565, %v567
    %v569 = vadd.f32 %v568, 0.0036580483
    %v570 = vmul.f32 %v565, %v569
    %v571 = vadd.f32 %v570, 0.05243302
    %v572 = vmul.f32 %v565, %v571
    %v573 = vadd.f32 %v572, 0.18741608
    %v574 = vmul.f32 %v565, %v573
    %v575 = vadd.f32 %v574, 1.1283791
    %v576 = vmul.f32 %v361, %v575
    %v577 = vmul.f32 %v565, 3.8918573e-05
    %v578 = vadd.f32 %v577, 0.001143296
    %v579 = vmul.f32 %v565, %v578
    %v580 = vadd.f32 %v579, 0.014752088
    %v581 = vmul.f32 %v565, %v580
    %v582 = vadd.f32 %v581, 0.112945676
    %v583 = vmul.f32 %v565, %v582
    %v584 = vadd.f32 %v583, 0.4994258
    %v585 = vmul.f32 %v565, %v584
    %v586 = vadd.f32 %v585, 1.0
    %v587 = vrcp.pop %v586
    %v588 = vmul.f32 %v586, %v587
    %v589 = vsub.f32 1.0, %v588
    %v590 = vmul.f32 %v587, %v589
    %v591 = vadd.f32 %v587, %v590
    %vm592 = vweird.f32 %v586
    %vm593 = vweird.f32 %v587
    %vm594 = vmor %vm592, %vm593
    %v595 = vsel %vm594, %v587, %v591
    %v596 = vand.u32 2147483647, %v586
    %vm597 = vcmp.eq.f32.partialorder %v596, 8.507059e+37
    %v598 = vand.u32 %v586, 2147483648
    %v599 = vor.u32 1.1754944e-38, %v598
    %v600 = vsel %vm597, %v599, %v595
    %v601 = vmul.f32 %v576, %v600
    %v602 = vmin.f32 %v601, 1.0
    %v603 = vmax.f32 %v602, -1.0
    %v604 = vmul.f32 %v362, %v362
    %v605 = vmin.f32 16.0, %v604
    %v606 = vmul.f32 %v605, 2.1237322e-06
    %v607 = vadd.f32 %v606, 0.00028619796
    %v608 = vmul.f32 %v605, %v607
    %v609 = vadd.f32 %v608, 0.0036580483
    %v610 = vmul.f32 %v605, %v609
    %v611 = vadd.f32 %v610, 0.05243302
    %v612 = vmul.f32 %v605, %v611
    %v613 = vadd.f32 %v612, 0.18741608
    %v614 = vmul.f32 %v605, %v613
    %v615 = vadd.f32 %v614, 1.1283791
    %v616 = vmul.f32 %v362, %v615
    %v617 = vmul.f32 %v605, 3.8918573e-05
    %v618 = vadd.f32 %v617, 0.001143296
    %v619 = vmul.f32 %v605, %v618
    %v620 = vadd.f32 %v619, 0.014752088
    %v621 = vmul.f32 %v605, %v620
    %v622 = vadd.f32 %v621, 0.112945676
    %v623 = vmul.f32 %v605, %v622
    %v624 = vadd.f32 %v623, 0.4994258
    %v625 = vmul.f32 %v605, %v624
    %v626 = vadd.f32 %v625, 1.0
    %v627 = vrcp.pop %v626
    %v628 = vmul.f32 %v626, %v627
    %v629 = vsub.f32 1.0, %v628
    %v630 = vmul.f32 %v627, %v629
    %v631 = vadd.f32 %v627, %v630
    %vm632 = vweird.f32 %v626
    %vm633 = vweird.f32 %v627
    %vm634 = vmor %vm632, %vm633
    %v635 = vsel %vm634, %v627, %v631
    %v636 = vand.u32 2147483647, %v626
    %vm637 = vcmp.eq.f32.partialorder %v636, 8.507059e+37
    %v638 = vand.u32 %v626, 2147483648
    %v639 = vor.u32 1.1754944e-38, %v638
    %v640 = vsel %vm637, %v639, %v635
    %v641 = vmul.f32 %v616, %v640
    %v642 = vmin.f32 %v641, 1.0
    %v643 = vmax.f32 %v642, -1.0
    %v644 = vmul.f32 %v363, %v363
    %v645 = vmin.f32 16.0, %v644
    %v646 = vmul.f32 %v645, 2.1237322e-06
    %v647 = vadd.f32 %v646, 0.00028619796
    %v648 = vmul.f32 %v645, %v647
    %v649 = vadd.f32 %v648, 0.0036580483
    %v650 = vmul.f32 %v645, %v649
    %v651 = vadd.f32 %v650, 0.05243302
    %v652 = vmul.f32 %v645, %v651
    %v653 = vadd.f32 %v652, 0.18741608
    %v654 = vmul.f32 %v645, %v653
    %v655 = vadd.f32 %v654, 1.1283791
    %v656 = vmul.f32 %v363, %v655
    %v657 = vmul.f32 %v645, 3.8918573e-05
    %v658 = vadd.f32 %v657, 0.001143296
    %v659 = vmul.f32 %v645, %v658
    %v660 = vadd.f32 %v659, 0.014752088
    %v661 = vmul.f32 %v645, %v660
    %v662 = vadd.f32 %v661, 0.112945676
    %v663 = vmul.f32 %v645, %v662
    %v664 = vadd.f32 %v663, 0.4994258
    %v665 = vmul.f32 %v645, %v664
    %v666 = vadd.f32 %v665, 1.0
    %v667 = vrcp.pop %v666
    %v668 = vmul.f32 %v666, %v667
    %v669 = vsub.f32 1.0, %v668
    %v670 = vmul.f32 %v667, %v669
    %v671 = vadd.f32 %v667, %v670
    %vm672 = vweird.f32 %v666
    %vm673 = vweird.f32 %v667
    %vm674 = vmor %vm672, %vm673
    %v675 = vsel %vm674, %v667, %v671
    %v676 = vand.u32 2147483647, %v666
    %vm677 = vcmp.eq.f32.partialorder %v676, 8.507059e+37
    %v678 = vand.u32 %v666, 2147483648
    %v679 = vor.u32 1.1754944e-38, %v678
    %v680 = vsel %vm677, %v679, %v675
    %v681 = vmul.f32 %v656, %v680
    %v682 = vmin.f32 %v681, 1.0
    %v683 = vmax.f32 %v682, -1.0
    %v684 = vadd.f32 %v403, 1.0
    %v685 = vadd.f32 %v443, 1.0
    %v686 = vadd.f32 %v483, 1.0
    %v687 = vadd.f32 %v523, 1.0
    %v688 = vadd.f32 %v563, 1.0
    %v689 = vadd.f32 %v603, 1.0
    %v690 = vadd.f32 %v643, 1.0
    %v691 = vadd.f32 %v683, 1.0
    %v692 = vmul.f32 %v348, %v684
    %v693 = vmul.f32 %v349, %v685
    %v694 = vmul.f32 %v350, %v686
    %v695 = vmul.f32 %v351, %v687
    %v696 = vmul.f32 %v352, %v688
    %v697 = vmul.f32 %v353, %v689
    %v698 = vmul.f32 %v354, %v690
    %v699 = vmul.f32 %v355, %v691
    %v700 = vpack.c.bf16 %v696, %v692
    %v701 = vpack.c.bf16 %v697, %v693
    %v702 = vpack.c.bf16 %v698, %v694
    %v703 = vpack.c.bf16 %v699, %v695
    %v704 = vld [vmem:[#allocation8] sm:$0xf]
    %v705 = vld [vmem:[#allocation8 + $0x4] sm:$0xf]
    %v706 = vld [vmem:[#allocation8 + $0x8] sm:$0xf]
    %v707 = vld [vmem:[#allocation8 + $0xc] sm:$0xf]
    %v708 = vld [vmem:[#allocation8 + $0x10] sm:$0xf]
    %v709 = vld [vmem:[#allocation8 + $0x14] sm:$0xf]
    %v710 = vld [vmem:[#allocation8 + $0x18] sm:$0xf]
    %v711 = vld [vmem:[#allocation8 + $0x1c] sm:$0xf]
    %v712 = vld [vmem:[#allocation8 + $0x20] sm:$0xf]
    %v713 = vld [vmem:[#allocation8 + $0x24] sm:$0xf]
    %v714 = vld [vmem:[#allocation8 + $0x28] sm:$0xf]
    %v715 = vld [vmem:[#allocation8 + $0x2c] sm:$0xf]
    %v716 = vld [vmem:[#allocation8 + $0x30] sm:$0xf]
    %v717 = vld [vmem:[#allocation8 + $0x34] sm:$0xf]
    %v718 = vld [vmem:[#allocation8 + $0x38] sm:$0xf]
    %v719 = vld [vmem:[#allocation8 + $0x3c] sm:$0xf]
    %v720 = vld [vmem:[#allocation8 + $0x40] sm:$0xf]
    %v721 = vld [vmem:[#allocation8 + $0x44] sm:$0xf]
    %v722 = vld [vmem:[#allocation8 + $0x48] sm:$0xf]
    %v723 = vld [vmem:[#allocation8 + $0x4c] sm:$0xf]
    %v724 = vld [vmem:[#allocation8 + $0x50] sm:$0xf]
    %v725 = vld [vmem:[#allocation8 + $0x54] sm:$0xf]
    %v726 = vld [vmem:[#allocation8 + $0x58] sm:$0xf]
    %v727 = vld [vmem:[#allocation8 + $0x5c] sm:$0xf]
    %v728 = vld [vmem:[#allocation8 + $0x60] sm:$0xf]
    %v729 = vld [vmem:[#allocation8 + $0x64] sm:$0xf]
    %v730 = vld [vmem:[#allocation8 + $0x68] sm:$0xf]
    %v731 = vld [vmem:[#allocation8 + $0x6c] sm:$0xf]
    %v732 = vld [vmem:[#allocation8 + $0x70] sm:$0xf]
    %v733 = vld [vmem:[#allocation8 + $0x74] sm:$0xf]
    %v734 = vld [vmem:[#allocation8 + $0x78] sm:$0xf]
    %v735 = vld [vmem:[#allocation8 + $0x7c] sm:$0xf]
    %v736 = vld [vmem:[#allocation8 + $0x80] sm:$0xf]
    %v737 = vld [vmem:[#allocation8 + $0x84] sm:$0xf]
    %v738 = vld [vmem:[#allocation8 + $0x88] sm:$0xf]
    %v739 = vld [vmem:[#allocation8 + $0x8c] sm:$0xf]
    %v740 = vld [vmem:[#allocation8 + $0x90] sm:$0xf]
    %v741 = vld [vmem:[#allocation8 + $0x94] sm:$0xf]
    %v742 = vld [vmem:[#allocation8 + $0x98] sm:$0xf]
    %v743 = vld [vmem:[#allocation8 + $0x9c] sm:$0xf]
    %v744 = vld [vmem:[#allocation8 + $0xa0] sm:$0xf]
    %v745 = vld [vmem:[#allocation8 + $0xa4] sm:$0xf]
    %v746 = vld [vmem:[#allocation8 + $0xa8] sm:$0xf]
    %v747 = vld [vmem:[#allocation8 + $0xac] sm:$0xf]
    %v748 = vld [vmem:[#allocation8 + $0xb0] sm:$0xf]
    %v749 = vld [vmem:[#allocation8 + $0xb4] sm:$0xf]
    %v750 = vld [vmem:[#allocation8 + $0xb8] sm:$0xf]
    %v751 = vld [vmem:[#allocation8 + $0xbc] sm:$0xf]
    %v752 = vld [vmem:[#allocation8 + $0xc0] sm:$0xf]
    %v753 = vld [vmem:[#allocation8 + $0xc4] sm:$0xf]
    %v754 = vld [vmem:[#allocation8 + $0xc8] sm:$0xf]
    %v755 = vld [vmem:[#allocation8 + $0xcc] sm:$0xf]
    %v756 = vld [vmem:[#allocation8 + $0xd0] sm:$0xf]
    %v757 = vld [vmem:[#allocation8 + $0xd4] sm:$0xf]
    %v758 = vld [vmem:[#allocation8 + $0xd8] sm:$0xf]
    %v759 = vld [vmem:[#allocation8 + $0xdc] sm:$0xf]
    %v760 = vld [vmem:[#allocation8 + $0xe0] sm:$0xf]
    %v761 = vld [vmem:[#allocation8 + $0xe4] sm:$0xf]
    %v762 = vld [vmem:[#allocation8 + $0xe8] sm:$0xf]
    %v763 = vld [vmem:[#allocation8 + $0xec] sm:$0xf]
    %v764 = vld [vmem:[#allocation8 + $0xf0] sm:$0xf]
    %v765 = vld [vmem:[#allocation8 + $0xf4] sm:$0xf]
    %v766 = vld [vmem:[#allocation8 + $0xf8] sm:$0xf]
    %v767 = vld [vmem:[#allocation8 + $0xfc] sm:$0xf]
    %v768 = vld [vmem:[%s4] sm:$0x1]
    %v770 = vperm.slane %v768, 0
    %v836 = vunpack.c.l.b16 %v704
    %v837 = vunpack.c.l.b16 %v705
    %v838 = vunpack.c.l.b16 %v706
    %v839 = vunpack.c.l.b16 %v707
    %v840 = vunpack.c.l.b16 %v708
    %v841 = vunpack.c.l.b16 %v709
    %v842 = vunpack.c.l.b16 %v710
    %v843 = vunpack.c.l.b16 %v711
    %v844 = vunpack.c.l.b16 %v712
    %v845 = vunpack.c.l.b16 %v713
    %v846 = vunpack.c.l.b16 %v714
    %v847 = vunpack.c.l.b16 %v715
    %v848 = vunpack.c.l.b16 %v716
    %v849 = vunpack.c.l.b16 %v717
    %v850 = vunpack.c.l.b16 %v718
    %v851 = vunpack.c.l.b16 %v719
    %v852 = vunpack.c.l.b16 %v720
    %v853 = vunpack.c.l.b16 %v721
    %v854 = vunpack.c.l.b16 %v722
    %v855 = vunpack.c.l.b16 %v723
    %v856 = vunpack.c.l.b16 %v724
    %v857 = vunpack.c.l.b16 %v725
    %v858 = vunpack.c.l.b16 %v726
    %v859 = vunpack.c.l.b16 %v727
    %v860 = vunpack.c.l.b16 %v728
    %v861 = vunpack.c.l.b16 %v729
    %v862 = vunpack.c.l.b16 %v730
    %v863 = vunpack.c.l.b16 %v731
    %v864 = vunpack.c.l.b16 %v732
    %v865 = vunpack.c.l.b16 %v733
    %v866 = vunpack.c.l.b16 %v734
    %v867 = vunpack.c.l.b16 %v735
    %v868 = vunpack.c.l.b16 %v736
    %v869 = vunpack.c.l.b16 %v737
    %v870 = vunpack.c.l.b16 %v738
    %v871 = vunpack.c.l.b16 %v739
    %v872 = vunpack.c.l.b16 %v740
    %v873 = vunpack.c.l.b16 %v741
    %v874 = vunpack.c.l.b16 %v742
    %v875 = vunpack.c.l.b16 %v743
    %v876 = vunpack.c.l.b16 %v744
    %v877 = vunpack.c.l.b16 %v745
    %v878 = vunpack.c.l.b16 %v746
    %v879 = vunpack.c.l.b16 %v747
    %v880 = vunpack.c.l.b16 %v748
    %v881 = vunpack.c.l.b16 %v749
    %v882 = vunpack.c.l.b16 %v750
    %v883 = vunpack.c.l.b16 %v751
    %v884 = vunpack.c.l.b16 %v752
    %v885 = vunpack.c.l.b16 %v753
    %v886 = vunpack.c.l.b16 %v754
    %v887 = vunpack.c.l.b16 %v755
    %v888 = vunpack.c.l.b16 %v756
    %v889 = vunpack.c.l.b16 %v757
    %v890 = vunpack.c.l.b16 %v758
    %v891 = vunpack.c.l.b16 %v759
    %v892 = vunpack.c.l.b16 %v760
    %v893 = vunpack.c.l.b16 %v761
    %v894 = vunpack.c.l.b16 %v762
    %v895 = vunpack.c.l.b16 %v763
    %v896 = vunpack.c.l.b16 %v764
    %v897 = vunpack.c.l.b16 %v765
    %v898 = vunpack.c.l.b16 %v766
    %v899 = vunpack.c.l.b16 %v767
    %v900 = vpack.c.b16 %v837, %v836
    %v901 = vpack.c.b16 %v839, %v838
    %v902 = vpack.c.b16 %v841, %v840
    %v903 = vpack.c.b16 %v843, %v842
    %v904 = vpack.c.b16 %v845, %v844
    %v905 = vpack.c.b16 %v847, %v846
    %v906 = vpack.c.b16 %v849, %v848
    %v907 = vpack.c.b16 %v851, %v850
    %v908 = vpack.c.b16 %v853, %v852
    %v909 = vpack.c.b16 %v855, %v854
    %v910 = vpack.c.b16 %v857, %v856
    %v911 = vpack.c.b16 %v859, %v858
    %v912 = vpack.c.b16 %v861, %v860
    %v913 = vpack.c.b16 %v863, %v862
    %v914 = vpack.c.b16 %v865, %v864
    %v915 = vpack.c.b16 %v867, %v866
    %v916 = vpack.c.b16 %v869, %v868
    %v917 = vpack.c.b16 %v871, %v870
    %v918 = vpack.c.b16 %v873, %v872
    %v919 = vpack.c.b16 %v875, %v874
    %v920 = vpack.c.b16 %v877, %v876
    %v921 = vpack.c.b16 %v879, %v878
    %v922 = vpack.c.b16 %v881, %v880
    %v923 = vpack.c.b16 %v883, %v882
    %v924 = vpack.c.b16 %v885, %v884
    %v925 = vpack.c.b16 %v887, %v886
    %v926 = vpack.c.b16 %v889, %v888
    %v927 = vpack.c.b16 %v891, %v890
    %v928 = vpack.c.b16 %v893, %v892
    %v929 = vpack.c.b16 %v895, %v894
    %v930 = vpack.c.b16 %v897, %v896
    %v931 = vpack.c.b16 %v899, %v898
    %964 = vmatpush.bf16.msra.mxu0 %v907
    %965 = vmatpush.bf16.msra.mxu0 %v906
    %966 = vmatpush.bf16.msra.mxu0 %v905
    %967 = vmatpush.bf16.msra.mxu0 %v904
    %968 = vmatpush.bf16.msra.mxu0 %v903
    %969 = vmatpush.bf16.msra.mxu0 %v902
    %970 = vmatpush.bf16.msra.mxu0 %v901
    %971 = vmatpush.bf16.msra.mxu0 %v900
    %972 = vmatmul.bf16.gmra.mxu0 %v700
    %v973 = vpop.f32.mrf.mxu0
    %v974 = vadd.f32 %v770, %v973
    %v975 = vpop.f32.mrf.mxu0
    %v976 = vadd.f32 %v770, %v975
    %977 = vdwg.mxu0
    %978 = vmatpush.bf16.msra.mxu0 %v915
    %979 = vmatpush.bf16.msra.mxu0 %v914
    %980 = vmatpush.bf16.msra.mxu0 %v913
    %981 = vmatpush.bf16.msra.mxu0 %v912
    %982 = vmatpush.bf16.msra.mxu0 %v911
    %983 = vmatpush.bf16.msra.mxu0 %v910
    %984 = vmatpush.bf16.msra.mxu0 %v909
    %985 = vmatpush.bf16.msra.mxu0 %v908
    %986 = vmatmul.bf16.gmra.mxu0 %v701
    %v987 = vpop.f32.mrf.mxu0
    %v988 = vadd.f32 %v974, %v987
    %v989 = vpop.f32.mrf.mxu0
    %v990 = vadd.f32 %v976, %v989
    %991 = vdwg.mxu0
    %992 = vmatpush.bf16.msra.mxu0 %v923
    %993 = vmatpush.bf16.msra.mxu0 %v922
    %994 = vmatpush.bf16.msra.mxu0 %v921
    %995 = vmatpush.bf16.msra.mxu0 %v920
    %996 = vmatpush.bf16.msra.mxu0 %v919
    %997 = vmatpush.bf16.msra.mxu0 %v918
    %998 = vmatpush.bf16.msra.mxu0 %v917
    %999 = vmatpush.bf16.msra.mxu0 %v916
    %1000 = vmatmul.bf16.gmra.mxu0 %v702
    %v1001 = vpop.f32.mrf.mxu0
    %v1002 = vadd.f32 %v988, %v1001
    %v1003 = vpop.f32.mrf.mxu0
    %v1004 = vadd.f32 %v990, %v1003
    %1005 = vdwg.mxu0
    %1006 = vmatpush.bf16.msra.mxu0 %v931
    %1007 = vmatpush.bf16.msra.mxu0 %v930
    %1008 = vmatpush.bf16.msra.mxu0 %v929
    %1009 = vmatpush.bf16.msra.mxu0 %v928
    %1010 = vmatpush.bf16.msra.mxu0 %v927
    %1011 = vmatpush.bf16.msra.mxu0 %v926
    %1012 = vmatpush.bf16.msra.mxu0 %v925
    %1013 = vmatpush.bf16.msra.mxu0 %v924
    %1014 = vmatmul.bf16.gmra.mxu0 %v703
    %v1015 = vpop.f32.mrf.mxu0
    %v1016 = vadd.f32 %v1002, %v1015
    %v1017 = vpop.f32.mrf.mxu0
    %v1018 = vadd.f32 %v1004, %v1017
    %1019 = vdwg.mxu0
    %1020 = vst [vmem:[#allocation10] sm:$0xff] %v1016
    %1021 = vst [vmem:[#allocation10 + $0x8] sm:$0xff] %v1018
    // Predicated region
    $region38: #{tpu_custom_call.1} parent=1 // pred_check
      _
    $region39: #{tpu_custom_call.1} parent=1 // pred_check_branch
      %1023 = sbr.rel (0) target = $region41
    $region40: #{tpu_custom_call.1} parent=1 // pred_region
      %1025 = vsyncadd [#allocation4], 0
      %s1026 = sshll.u32 [#allocation10], 4
      %s1027 = int_to_ptr.vmem [resolvable:$true] %s1026
      %s1028 = sshll.u32 %s5, 4
      %s1029 = int_to_ptr.hbm [resolvable:$true] %s1028
      %1034 = dma.vmem_to_hbm [thread:$0]  %s1027, 256, %s1029, [#allocation4], 128, 128, 8
    $region41: #{tpu_custom_call.1} parent=1 // pred_fallthru
      _
    // Predicated region
    $region42: #{tpu_custom_call.1} parent=1 // pred_check
      _
    $region43: #{tpu_custom_call.1} parent=1 // pred_check_branch
      %1036 = sbr.rel (0) target = $region45
    $region44: #{tpu_custom_call.1} parent=1 // pred_region
      %1038 = dma.done [#allocation4], 256
    $region45: #{tpu_custom_call.1} parent=1 // pred_fallthru
      _
    %1039 = vsyncpa [#allocation3], 1
    %1040 = vsyncpa [#allocation6], 1
    %1041 = vsyncpa [#allocation9], 1
    %1042 = vsyncpa [#allocation4], 1

</llo_original>
